<compile_context>
chip_gen: v7x
topology: tpu7x:2x2x1
jax: 0.10.0
libtpu: 0.0.40
codegen_flags: <defaults>
</compile_context>

<pallas_src>
import functools

import jax
import jax.numpy as jnp
from jax import lax
from jax.experimental import pallas as pl
from jax.experimental.pallas import tpu as pltpu

K = 4                             # ConvTranspose2d kernel size everywhere
HALO = 128                        # right halo (lanes) of each conv input tile
VMEM_LIMIT = 32 * 1024 * 1024


def _round_up(x, m):
    return (x + m - 1) // m * m


def _pick_tm(total):
    """Largest 128-multiple tile <= 512 dividing `total`, preferring >=2 steps."""
    cands = [tm for tm in (512, 384, 256, 128) if total % tm == 0]
    for tm in cands:
        if total // tm >= 2:
            return tm
    return cands[-1]


# pltpu.roll is expected to follow the jnp.roll convention (element i moves to
# index i + shift, wrapping).  verify_roll_convention() may be called once
# outside of any trace to confirm this on the active backend and flip the
# convention if it ever disagrees; it is optional (the default is used when it
# has not been run), so jitted library use never requires priming.
_ROLL_LIKE_JNP = [True]


def verify_roll_convention():
    def kern(x_ref, o_ref):
        o_ref[...] = pltpu.roll(x_ref[...], shift=1, axis=1)

    x = lax.broadcasted_iota(jnp.float32, (8, 128), 1)
    y = pl.pallas_call(
        kern, out_shape=jax.ShapeDtypeStruct((8, 128), jnp.float32))(x)
    _ROLL_LIKE_JNP[0] = bool(float(y[0, 0]) == 127.0)


def _phase_taps(width):
    """Sub-pixel decomposition of ConvTranspose2d(k=4, s=2, p=1).

    For each output phase (py, px) (parity of the output pixel), returns the 4
    contributing taps as (ky, kx, lane_offset), where lane_offset indexes the
    input image zero-padded by 1 pixel and flattened row-major with row stride
    width + 2.
    """
    wp = width + 2
    taps = []
    for py in (0, 1):
        ky_dy = ((1, 0), (3, -1)) if py == 0 else ((0, 1), (2, 0))
        for px in (0, 1):
            kx_dx = ((1, 0), (3, -1)) if px == 0 else ((0, 1), (2, 0))
            taps.append([(ky, kx, (dy + 1) * wp + (dx + 1))
                         for ky, dy in ky_dy for kx, dx in kx_dx])
    return taps


# ------------------------- layer 0: 1x1 -> 4x4 projection --------------------

def _proj_kernel(x_ref, w_ref, o_ref):
    o_ref[...] = jnp.dot(x_ref[...], w_ref[...],
                         preferred_element_type=jnp.float32).astype(o_ref.dtype)


def project_layer(latent, w):
    """ConvTranspose2d(stride=1, pad=0) on a 1x1 input == a single GEMM.

    latent: (N, Cin, 1, 1)  ->  bf16 slab (Cout, N*4*4).
    """
    N, Cin = latent.shape[0], latent.shape[1]
    Cout = w.shape[1]
    cols = Cout * K * K
    x = latent.reshape(N, Cin).astype(jnp.bfloat16)
    wm = w.reshape(Cin, cols).astype(jnp.bfloat16)
    tn = 512 if cols % 512 == 0 else cols
    y = pl.pallas_call(
        _proj_kernel,
        out_shape=jax.ShapeDtypeStruct((N, cols), jnp.bfloat16),
        grid=(cols // tn,),
        in_specs=[
            pl.BlockSpec((N, Cin), lambda j: (0, 0)),
            pl.BlockSpec((Cin, tn), lambda j: (0, j)),
        ],
        out_specs=pl.BlockSpec((N, tn), lambda j: (0, j)),
        compiler_params=pltpu.CompilerParams(
            dimension_semantics=("parallel",),
            vmem_limit_bytes=VMEM_LIMIT),
    )(x, wm)
    # (N, Cout*16) -> (Cout, N*16); per-image 4x4 plane stays row-major.
    return y.reshape(N, Cout, K * K).transpose(1, 0, 2).reshape(Cout, N * K * K)


# -------------------- stride-2 ConvTranspose2d (sub-pixel) -------------------

def _convt_s2_kernel(xa_ref, xh_ref, w_ref, o0, o1, o2, o3, *,
                     shifts, tm, op_dtype, activation):
    """One lane tile: 4 output phases, each one MXU dot of depth 4*Cin."""
    # Tile + right halo as a value (no scratch store/load round trip).
    # TODO(synk): keep this window bf16 once packed lane rolls are universal.
    xw = jnp.concatenate(
        [xa_ref[...].astype(jnp.float32), xh_ref[...].astype(jnp.float32)],
        axis=1)                                         # (Cin, TM + HALO)

    cache = {}

    def window(s):                                      # shared across phases
        if s not in cache:
            rolled = xw if s == 0 else pltpu.roll(xw, shift=s, axis=1)
            cache[s] = rolled[:, :tm].astype(op_dtype)  # (Cin, TM)
        return cache[s]

    outs = (o0, o1, o2, o3)
    for p in range(4):
        rhs = jnp.concatenate([window(s) for s in shifts[p]], axis=0)
        y = jnp.dot(w_ref[p], rhs, preferred_element_type=jnp.float32)
        if activation == "tanh":
            y = jnp.tanh(y)
        outs[p][...] = y.astype(outs[p].dtype)


def conv_transpose_s2(x_slab, geom, w, activation="none",
                      out_dtype=jnp.bfloat16):
    """ConvTranspose2d(k=4, s=2, p=1, bias=False) on a (Cin, N*H*W) slab.

    Returns the (Cout, N*2H*2W) slab and the new geometry.
    """
    N, H, W = geom
    Cin, Cout = w.shape[0], w.shape[1]
    OH, OW = 2 * H, 2 * W
    wp = W + 2
    lp = (H + 2) * wp                      # per-image padded plane length
    l128 = _round_up(lp, 128)              # pad per image to 128, not to TM
    total = N * l128
    tm = _pick_tm(total)
    nt = total // tm
    wtot = tm + HALO

    # bf16 HBM stream; 1-pixel zero border turns the +/-1-pixel taps of the
    # sub-pixel decomposition into constant lane offsets.
    x = x_slab.astype(jnp.bfloat16).reshape(Cin, N, H, W)
    xpad = jnp.pad(x, ((0, 0), (0, 0), (1, 1), (1, 1)))
    xf = jnp.pad(xpad.reshape(Cin, N, lp), ((0, 0), (0, 0), (0, l128 - lp)))
    # Trailing TM zeros double as the last tile's halo.  Halo reads from the
    # (later cropped) garbage columns may cross into the next image's data;
    # those positions are never part of the valid output.
    xf = jnp.pad(xf.reshape(Cin, total), ((0, 0), (0, tm)))

    taps = _phase_taps(W)
    like_jnp = _ROLL_LIKE_JNP[0]
    shifts = tuple(
        tuple(((wtot - off) % wtot) if like_jnp else off for _, _, off in tp)
        for tp in taps)

    # Per-phase weights with the 4 taps concatenated along the contraction dim
    # (order matches the rhs concat in the kernel).  bf16 unless Cin is too
    # small for a packed sublane concat.
    op_dtype = jnp.bfloat16 if Cin % 16 == 0 else jnp.float32
    wcat = jnp.stack(
        [jnp.concatenate([w[:, :, ky, kx].T for ky, kx, _ in tp], axis=1)
         for tp in taps], axis=0).astype(op_dtype)      # (4, Cout, 4*Cin)

    hsteps = tm // HALO
    # TODO(synk): single-buffer the constant weight block (pl.Buffered(1))
    # once pipeline_mode is plumbed through pallas_call on all generations.
    outs = pl.pallas_call(
        functools.partial(_convt_s2_kernel, shifts=shifts, tm=tm,
                          op_dtype=op_dtype, activation=activation),
        out_shape=tuple(jax.ShapeDtypeStruct((Cout, total), out_dtype)
                        for _ in range(4)),
        grid=(nt,),
        in_specs=[
            pl.BlockSpec((Cin, tm), lambda j: (0, j)),               # tile
            pl.BlockSpec((Cin, HALO), lambda j: (0, (j + 1) * hsteps)),  # halo
            pl.BlockSpec((4, Cout, 4 * Cin), lambda j: (0, 0, 0)),   # weights
        ],
        out_specs=tuple(pl.BlockSpec((Cout, tm), lambda j: (0, j))
                        for _ in range(4)),
        compiler_params=pltpu.CompilerParams(
            dimension_semantics=("parallel",),
            vmem_limit_bytes=VMEM_LIMIT),
    )(xf, xf, wcat)

    # Crop row/lane padding and interleave the 4 phases -> (Cout, N*OH*OW).
    phases = [o.reshape(Cout, N, l128)[:, :, :lp]
               .reshape(Cout, N, H + 2, wp)[:, :, :H, :W] for o in outs]
    y = jnp.stack(phases, axis=0).reshape(2, 2, Cout, N, H, W)
    y = y.transpose(2, 3, 4, 0, 5, 1).reshape(Cout, N * OH * OW)
    return y, (N, OH, OW)


# --------------------------- fused BatchNorm + ReLU --------------------------

def _bn_relu_kernel(x_ref, g_ref, b_ref, o_ref):
    # Training-mode BatchNorm2d (batch stats, biased var, eps=1e-5) + ReLU.
    x = x_ref[...].astype(jnp.float32)                  # stats in f32
    mean = jnp.mean(x, axis=1, keepdims=True)
    var = jnp.mean(jnp.square(x - mean), axis=1, keepdims=True)
    y = (x - mean) * lax.rsqrt(var + 1e-5) * g_ref[...] + b_ref[...]
    o_ref[...] = jnp.maximum(y, 0.0).astype(o_ref.dtype)


def batchnorm_relu(x_cm, gamma, beta):
    """Fused BN+ReLU on a (C, M) slab; f32 stats, bf16 output.
    TODO(synk): two-pass M-tiled variant for very large N*H*W (v7x VMEM)."""
    C, M = x_cm.shape
    if C % 32 == 0:
        tc = 32
    elif C % 16 == 0:
        tc = 16
    else:
        tc = C
    return pl.pallas_call(
        _bn_relu_kernel,
        out_shape=jax.ShapeDtypeStruct((C, M), jnp.bfloat16),
        grid=(C // tc,),
        in_specs=[
            pl.BlockSpec((tc, M), lambda i: (i, 0)),
            pl.BlockSpec((tc, 1), lambda i: (i, 0)),
            pl.BlockSpec((tc, 1), lambda i: (i, 0)),
        ],
        out_specs=pl.BlockSpec((tc, M), lambda i: (i, 0)),
        compiler_params=pltpu.CompilerParams(
            dimension_semantics=("parallel",),
            vmem_limit_bytes=VMEM_LIMIT),
    )(x_cm, gamma.reshape(C, 1), beta.reshape(C, 1))


# --------------------------------- forward -----------------------------------

def generator_forward(latent, params):
    layers = params["layers"]
    N = latent.shape[0]
    assert latent.shape[2] == 1 and latent.shape[3] == 1

    # Layer 0: ConvTranspose2d(k=4, s=1, p=0) on the 1x1 latent == GEMM.
    slab = project_layer(latent, layers[0]["w"])
    slab = batchnorm_relu(slab, layers[0]["gamma"], layers[0]["beta"])
    geom = (N, K, K)

    # Layers 1..4: ConvTranspose2d(k=4, s=2, p=1) via sub-pixel decomposition.
    for i in range(1, len(layers)):
        layer = layers[i]
        assert layer["stride"] == 2 and layer["pad"] == 1
        is_last = i == len(layers) - 1
        slab, geom = conv_transpose_s2(
            slab, geom, layer["w"],
            activation="tanh" if is_last else "none",
            out_dtype=jnp.float32 if is_last else jnp.bfloat16)
        if not is_last:
            slab = batchnorm_relu(slab, layer["gamma"], layer["beta"])

    C = slab.shape[0]
    n, oh, ow = geom
    return slab.reshape(C, n, oh, ow).transpose(1, 0, 2, 3)      # NCHW


def init_params(key, latent_dim, hidden_size, num_channels):
    # Mirrors Generator.__init__: kernel 4, strides (1,2,2,2,2), pads (0,1,1,1,1).
    chans = [latent_dim, hidden_size * 8, hidden_size * 4,
             hidden_size * 2, hidden_size, num_channels]
    strides = [1, 2, 2, 2, 2]
    pads = [0, 1, 1, 1, 1]
    layers = []
    for i in range(5):
        key, k1, k2, k3 = jax.random.split(key, 4)
        w = 0.02 * jax.random.normal(k1, (chans[i], chans[i + 1], 4, 4),
                                     jnp.float32)
        layer = {"w": w, "stride": strides[i], "pad": pads[i]}
        if i < 4:  # BN + ReLU blocks only
            layer["gamma"] = 1.0 + 0.01 * jax.random.normal(
                k2, (chans[i + 1],), jnp.float32)
            layer["beta"] = 0.01 * jax.random.normal(
                k3, (chans[i + 1],), jnp.float32)
        layers.append(layer)
    return {"layers": layers}


# ------------------------ pure-JAX reference (checking) ----------------------

def generator_reference(latent, params):
    x = latent
    layers = params["layers"]
    for i, layer in enumerate(layers):
        pe = K - 1 - layer["pad"]
        w = layer["w"].astype(jnp.bfloat16)
        rhs = jnp.transpose(w[:, :, ::-1, ::-1], (1, 0, 2, 3))   # OIHW
        y = lax.conv_general_dilated(
            x.astype(jnp.bfloat16), rhs, window_strides=(1, 1),
            padding=[(pe, pe), (pe, pe)],
            lhs_dilation=(layer["stride"], layer["stride"]),
            dimension_numbers=("NCHW", "OIHW", "NCHW"),
            preferred_element_type=jnp.float32)
        if i == len(layers) - 1:
            x = jnp.tanh(y)
        else:
            mean = jnp.mean(y, axis=(0, 2, 3), keepdims=True)
            var = jnp.mean(jnp.square(y - mean), axis=(0, 2, 3), keepdims=True)
            g = layer["gamma"].reshape(1, -1, 1, 1)
            b = layer["beta"].reshape(1, -1, 1, 1)
            x = jnp.maximum((y - mean) * lax.rsqrt(var + 1e-5) * g + b, 0.0)
    return x


if __name__ == "__main__":
    # Small, shape-consistent config: (B, latent_dim, 1, 1) -> (B, 3, 64, 64).
    latent_dim, hidden_size, num_channels, batch = 16, 8, 3, 2
    key = jax.random.PRNGKey(0)
    kp, kx = jax.random.split(key)
    params = init_params(kp, latent_dim, hidden_size, num_channels)
    latent = jax.random.normal(kx, (batch, latent_dim, 1, 1), jnp.float32)

    verify_roll_convention()   # optional sanity check, run outside tracing

    fwd = jax.jit(lambda z: generator_forward(z, params))
    out = jax.block_until_ready(fwd(latent))
    assert out.shape == (batch, num_channels, 64, 64), out.shape
    assert bool(jnp.all(jnp.isfinite(out)))
    assert bool(jnp.all(jnp.abs(out) <= 1.0 + 1e-6))        # tanh range

    ref = jax.block_until_ready(
        jax.jit(lambda z: generator_reference(z, params))(latent))
    err = float(jnp.max(jnp.abs(out - ref)))
    assert err < 5e-2, f"max |pallas - reference| = {err}"
    print("KERNEL_OK")
</pallas_src>

<mosaic_0001>
module attributes {stable_mosaic.version = 11 : i64} {
  func.func @kern(%arg0: memref<8x128xf32, #tpu.memory_space<vmem>>, %arg1: memref<8x128xf32, #tpu.memory_space<vmem>>) attributes {dimension_semantics = [], scalar_prefetch = 0 : i64, scratch_operands = 0 : i64, tpu.core_type = #tpu.core_type<tc>} {
    %c0 = arith.constant 0 : index
    %c0_0 = arith.constant 0 : index
    %0 = vector.load %arg0[%c0, %c0_0] : memref<8x128xf32, #tpu.memory_space<vmem>>, vector<8x128xf32>
    %c1_i32 = arith.constant 1 : i32
    %1 = tpu.dynamic_rotate %0 by %c1_i32 dim 1 : vector<8x128xf32>, i32 -> vector<8x128xf32>
    %c0_1 = arith.constant 0 : index
    %c0_2 = arith.constant 0 : index
    %2 = vector.load %arg1[%c0_1, %c0_2] : memref<8x128xf32, #tpu.memory_space<vmem>>, vector<8x128xf32>
    tpu.vector_store %arg1[%c0_1, %c0_2], %1 {strides = array<i32>} : memref<8x128xf32, #tpu.memory_space<vmem>>, vector<8x128xf32>,
    return
  }
}

</mosaic_0001>

<llo_original>
// kernel: tpu_custom_call.1
$region0: #{tpu_custom_call.1}
  #allocation0 [shape = 'u32[]', space=smem, size = 0x4, offset = 0x4, fixed_abs, tag = 'smem constant byte address 0x4 - core index']
  #allocation1 [shape = 'u32[144,128]{1,0:T(1,128)}', space=vmem, size = 0x12000, scoped, tag = 'internal scratch']
  %s0 = inlined_call_operand.hbm [shape: f32[8,128], index: 0, kind: input, shape index: {}]
  %s1 = inlined_call_operand.hbm [shape: f32[8,128], index: 1, kind: output, shape index: {}]
  %s2 = sld [smem:[#allocation0]]
  $region18: #{tpu_custom_call.1} parent=0
    _
  %s4 = ssub.s32 1, %s2
  %s5 = scalar_select 0, %s4, %s2
  $region1: #{tpu_custom_call.1} parent=0
    #allocation2 [shape = 'u8[4096]{0}', space=vmem, size = 0x1000, scoped, tag = 'input window, operand 0, single buffered']
    #allocation3 [shape = 's32[1]{0}', space=sflag, size = 0x4, scoped, tag = 'scoped memory for tpu_custom_call.1']
    #allocation4 [shape = 's32[1]{0}', space=sflag, size = 0x4, scoped, tag = 'scoped memory for tpu_custom_call.1']
    #allocation5 [shape = 'u8[4096]{0}', space=vmem, size = 0x1000, scoped, tag = 'output window, operand 0, single buffered']
    %6 = vsyncpa [#allocation3], 0
    %7 = vsyncpa [#allocation4], 0
    // Predicated region
    $region2: #{tpu_custom_call.1} parent=1 // pred_check
      _
    $region3: #{tpu_custom_call.1} parent=1 // pred_check_branch
      %9 = sbr.rel (0) target = $region5
    $region4: #{tpu_custom_call.1} parent=1 // pred_region
      %s11 = ssub.s32 128, 128
      %12 = vsyncadd [#allocation3], %s11
      %s14 = sshll.u32 [#allocation2], 4
      %s15 = int_to_ptr.vmem [resolvable:$true] %s14
      %17 = dma.hbm_to_vmem [thread:$0]  %s0, 128, %s15, [#allocation3]
    $region5: #{tpu_custom_call.1} parent=1 // pred_fallthru
      _
    // Predicated region
    $region6: #{tpu_custom_call.1} parent=1 // pred_check
      _
    $region7: #{tpu_custom_call.1} parent=1 // pred_check_branch
      %19 = sbr.rel (0) target = $region9
    $region8: #{tpu_custom_call.1} parent=1 // pred_region
      %20 = dma.done [#allocation3], 128
    $region9: #{tpu_custom_call.1} parent=1 // pred_fallthru
      _
    %v21 = vld [vmem:[#allocation2] sm:$0xff]
    %22 = vrot.lane.b32.xlu0 %v21, 1
    %v23 = vpop.permute.xlu0 %22
    %24 = vst [vmem:[#allocation5] sm:$0xff] %v23
    // Predicated region
    $region10: #{tpu_custom_call.1} parent=1 // pred_check
      _
    $region11: #{tpu_custom_call.1} parent=1 // pred_check_branch
      %26 = sbr.rel (0) target = $region13
    $region12: #{tpu_custom_call.1} parent=1 // pred_region
      %s28 = ssub.s32 128, 128
      %29 = vsyncadd [#allocation4], %s28
      %s31 = sshll.u32 [#allocation5], 4
      %s32 = int_to_ptr.vmem [resolvable:$true] %s31
      %34 = dma.vmem_to_hbm [thread:$0]  %s32, 128, %s1, [#allocation4]
    $region13: #{tpu_custom_call.1} parent=1 // pred_fallthru
      _
    // Predicated region
    $region14: #{tpu_custom_call.1} parent=1 // pred_check
      _
    $region15: #{tpu_custom_call.1} parent=1 // pred_check_branch
      %36 = sbr.rel (0) target = $region17
    $region16: #{tpu_custom_call.1} parent=1 // pred_region
      %37 = dma.done [#allocation4], 128
    $region17: #{tpu_custom_call.1} parent=1 // pred_fallthru
      _
    %38 = vsyncpa [#allocation3], 1
    %39 = vsyncpa [#allocation4], 1

</llo_original>
